<compile_context>
chip_gen: v5e
topology: v5e:2x2
jax: 0.10.0
libtpu: 0.0.40
codegen_flags: <defaults>
</compile_context>

<pallas_src>
import functools

import jax
import jax.numpy as jnp
from jax.experimental import pallas as pl
from jax.experimental.pallas import tpu as pltpu

LANE = 128


def _round_up(x, m):
    return (x + m - 1) // m * m


def dnn_kernel(x_ref, w1_ref, b1_ref, w2_ref, b2_ref, w3_ref, b3_ref,
               w4_ref, b4_ref, o_ref, *, out_valid):
    # x tile: (tb, D) f32 raw input rows. Weights: bf16, VMEM-resident across the grid.
    # Biases: (1, out_pad) f32.
    x = x_ref[...].astype(w1_ref.dtype)          # f32 -> bf16 (MXU operand dtype), in-kernel

    # layer1 + ReLU (dropout = identity in eval mode); contraction runs with K = true D.
    h = jnp.dot(x, w1_ref[...], preferred_element_type=jnp.float32) + b1_ref[...]
    h = jnp.maximum(h, 0.0)

    # layer2 + ReLU
    h = jnp.dot(h.astype(w2_ref.dtype), w2_ref[...],
                preferred_element_type=jnp.float32) + b2_ref[...]
    h = jnp.maximum(h, 0.0)

    # layer3 + ReLU
    h = jnp.dot(h.astype(w3_ref.dtype), w3_ref[...],
                preferred_element_type=jnp.float32) + b3_ref[...]
    h = jnp.maximum(h, 0.0)

    # layer4 logits; mask padded lanes to -inf so the 128-wide softmax is exact.
    logits = jnp.dot(h.astype(w4_ref.dtype), w4_ref[...],
                     preferred_element_type=jnp.float32) + b4_ref[...]
    lane = jax.lax.broadcasted_iota(jnp.int32, logits.shape, 1)
    logits = jnp.where(lane < out_valid, logits, -jnp.inf)

    # stable softmax over dim=1; divide goes to the EUP via the approx reciprocal.
    m = jnp.max(logits, axis=1, keepdims=True)
    e = jnp.exp(logits - m)
    denom = jnp.sum(e, axis=1, keepdims=True)
    o_ref[...] = (e * pl.reciprocal(denom, approx=True)).astype(o_ref.dtype)


def pack_params(params, compute_dtype=jnp.bfloat16):
    """Pad output-feature dims up to 128 lanes and cast weights to the MXU compute dtype.
    w1 keeps its true input dim (layer 1 contracts with K = input_size directly).
    Biases stay f32 (bias add / ReLU / softmax run in f32 on the VPU/EUP)."""
    (w1, b1, w2, b2, w3, b3, w4, b4) = params

    def pad_w(w, pad_in):
        i, o = w.shape
        pi = (_round_up(i, LANE) - i) if pad_in else 0
        return jnp.pad(w, ((0, pi), (0, _round_up(o, LANE) - o))).astype(compute_dtype)

    def pad_b(b):
        b = b.reshape(1, -1)
        o = b.shape[1]
        return jnp.pad(b, ((0, 0), (0, _round_up(o, LANE) - o))).astype(jnp.float32)

    return (pad_w(w1, False), pad_b(b1), pad_w(w2, True), pad_b(b2),
            pad_w(w3, True), pad_b(b3), pad_w(w4, True), pad_b(b4))


def _usable_vmem_bytes():
    """~3/4 of physical VMEM: ~48 MiB on v7x (64 MiB/TC), ~96 MiB on v5e/v6e (128 MiB)."""
    try:
        cap = int(pltpu.get_tpu_info().vmem_capacity_bytes)
        if cap > 0:
            return cap * 3 // 4
    except Exception:
        pass
    return 48 * 1024 * 1024   # conservative fallback (v7x-safe)


def dnn_forward(x, packed_params, dims, *, block_b=1024):
    """Eval-mode forward. x: (B, D) float32. dims = (input_size, hidden_size, output_size).
    Returns (B, output_size) bfloat16 probabilities."""
    (w1, b1, w2, b2, w3, b3, w4, b4) = packed_params
    input_size, hidden_size, output_size = dims
    B, D = x.shape
    assert D == input_size == w1.shape[0]
    H_pad = w1.shape[1]
    O_pad = w4.shape[1]

    # Batch tile: multiple of 16 sublanes (bf16 output tiles), as large as sensible.
    # Cap at half the rounded batch when possible so the grid has >=2 steps (both v7x TCs).
    b_ceil = _round_up(B, 16)
    tb = min(block_b, b_ceil)
    if b_ceil >= 32:
        tb = min(tb, b_ceil // 2)
    tb = max(16, (tb // 16) * 16)
    B_pad = _round_up(B, tb)
    grid = (B_pad // tb,)

    # Only the batch dim is (possibly) padded; x stays f32 and D-lanes wide -- no
    # materialized lane-pad / bf16 copy in the wrapper.
    x_p = x if B_pad == B else jnp.pad(x, ((0, B_pad - B), (0, 0)))

    # VMEM budget: resident weights/biases (double-buffered by the pipeliner) plus
    # double-buffered x / out tiles, with slack; capped by the hardware generation.
    resident = sum(int(p.size) * p.dtype.itemsize for p in packed_params)
    tiles = 2 * tb * D * x.dtype.itemsize + 2 * tb * O_pad * 2
    vmem_limit = int(min(max(4 * (resident + tiles), 8 * 1024 * 1024),
                         _usable_vmem_bytes()))

    # Advisory cost estimate from the true (unpadded) dims.
    flops = 2 * B * (input_size * hidden_size + 2 * hidden_size * hidden_size
                     + hidden_size * output_size)
    param_bytes = ((input_size * hidden_size + 2 * hidden_size * hidden_size
                    + hidden_size * output_size) * 2
                   + (3 * hidden_size + output_size) * 4)
    bytes_accessed = B * D * 4 + param_bytes + B * output_size * 2

    kernel = functools.partial(dnn_kernel, out_valid=output_size)
    const = lambda i: (0, 0)   # weights/biases: DMA'd once, resident across the grid

    out_padded = pl.pallas_call(
        kernel,
        out_shape=jax.ShapeDtypeStruct((B_pad, O_pad), jnp.bfloat16),
        grid=grid,
        in_specs=[
            pl.BlockSpec((tb, D), lambda i: (i, 0)),       # x: streamed per batch tile (f32)
            pl.BlockSpec((D, H_pad), const),               # w1 (D, 128) bf16
            pl.BlockSpec((1, H_pad), const),               # b1
            pl.BlockSpec((H_pad, H_pad), const),           # w2
            pl.BlockSpec((1, H_pad), const),               # b2
            pl.BlockSpec((H_pad, H_pad), const),           # w3
            pl.BlockSpec((1, H_pad), const),               # b3
            pl.BlockSpec((H_pad, O_pad), const),           # w4
            pl.BlockSpec((1, O_pad), const),               # b4
        ],
        out_specs=pl.BlockSpec((tb, O_pad), lambda i: (i, 0)),
        compiler_params=pltpu.CompilerParams(
            dimension_semantics=("parallel",),
            vmem_limit_bytes=vmem_limit),
        cost_estimate=pl.CostEstimate(
            flops=int(flops),
            transcendentals=int(B * O_pad),
            bytes_accessed=int(bytes_accessed)),
    )(x_p, w1, b1, w2, b2, w3, b3, w4, b4)

    # Consumers that can take the padded bf16 slab should skip this slice (saves a re-read);
    # it is kept here to match the nn.Module's (B, output_size) API.
    return out_padded[:B, :output_size]


def init_params(key, input_size, hidden_size, output_size):
    """Deterministic parameter init (uniform, like PyTorch Linear default bounds).
    Weights stored as (in, out) so the kernel computes x @ W + b (== nn.Linear)."""
    keys = jax.random.split(key, 8)

    def linear(kw, kb, fan_in, fan_out):
        bound = 1.0 / (fan_in ** 0.5)
        w = jax.random.uniform(kw, (fan_in, fan_out), jnp.float32, -bound, bound)
        b = jax.random.uniform(kb, (fan_out,), jnp.float32, -bound, bound)
        return w, b

    w1, b1 = linear(keys[0], keys[1], input_size, hidden_size)
    w2, b2 = linear(keys[2], keys[3], hidden_size, hidden_size)
    w3, b3 = linear(keys[4], keys[5], hidden_size, hidden_size)
    w4, b4 = linear(keys[6], keys[7], hidden_size, output_size)
    return (w1, b1, w2, b2, w3, b3, w4, b4)


def dnn_reference(x, params, compute_dtype=jnp.float32):
    """Pure-JAX reference of the same forward (eval mode).
    compute_dtype=bf16 reproduces the kernel's matmul numerics (f32 accumulation)."""
    (w1, b1, w2, b2, w3, b3, w4, b4) = params

    def mm(a, w):
        return jnp.dot(a.astype(compute_dtype), w.astype(compute_dtype),
                       preferred_element_type=jnp.float32)

    h = jax.nn.relu(mm(x, w1) + b1)
    h = jax.nn.relu(mm(h, w2) + b2)
    h = jax.nn.relu(mm(h, w3) + b3)
    return jax.nn.softmax(mm(h, w4) + b4, axis=1)


if __name__ == "__main__":
    # Shapes consistent with the module: torch.prod over dim=2 of (N,28,28) -> 28 features,
    # hidden_size nominally 100 (kept small here), output_size=10.
    batch = 8
    input_size = 28
    hidden_size = 32
    output_size = 10

    key = jax.random.PRNGKey(0)
    kx, kp = jax.random.split(key)
    x = jax.random.normal(kx, (batch, input_size), jnp.float32)
    params = init_params(kp, input_size, hidden_size, output_size)
    packed = pack_params(params)

    out = dnn_forward(x, packed, (input_size, hidden_size, output_size))
    out = jax.block_until_ready(out)

    assert out.shape == (batch, output_size)
    out_f32 = out.astype(jnp.float32)
    # numerics-matched reference (bf16 matmul inputs, f32 accumulation)
    ref_bf16 = dnn_reference(x, params, compute_dtype=jnp.bfloat16)
    assert jnp.allclose(out_f32, ref_bf16, atol=1e-2, rtol=1e-2), "mismatch vs bf16 reference"
    # loose sanity check vs full-f32 reference
    ref_f32 = dnn_reference(x, params, compute_dtype=jnp.float32)
    assert jnp.allclose(out_f32, ref_f32, atol=5e-2), "mismatch vs f32 reference"
    # softmax rows must sum to 1 (bf16 output + approx reciprocal => slightly looser tol)
    assert jnp.allclose(jnp.sum(out_f32, axis=1), jnp.ones(batch), atol=2e-2)

    print("KERNEL_OK")
</pallas_src>

<mosaic_0001>
module attributes {stable_mosaic.version = 11 : i64} {
  func.func @dnn_kernel(%arg0: i32, %arg1: memref<16x28xf32, #tpu.memory_space<vmem>>, %arg2: memref<28x128xbf16, #tpu.memory_space<vmem>>, %arg3: memref<1x128xf32, #tpu.memory_space<vmem>>, %arg4: memref<128x128xbf16, #tpu.memory_space<vmem>>, %arg5: memref<1x128xf32, #tpu.memory_space<vmem>>, %arg6: memref<128x128xbf16, #tpu.memory_space<vmem>>, %arg7: memref<1x128xf32, #tpu.memory_space<vmem>>, %arg8: memref<128x128xbf16, #tpu.memory_space<vmem>>, %arg9: memref<1x128xf32, #tpu.memory_space<vmem>>, %arg10: memref<16x128xbf16, #tpu.memory_space<vmem>>) attributes {dimension_semantics = [#tpu.dimension_semantics<parallel>], iteration_bounds = array<i64: 1>, scalar_prefetch = 0 : i64, scratch_operands = 0 : i64, tpu.core_type = #tpu.core_type<tc>, window_params = [{transform_indices = @transform_0, window_bounds = array<i64: 16, 28>}, {pipeline_mode = #tpu.pipeline_mode<synchronous>, transform_indices = @transform_1, window_bounds = array<i64: 28, 128>}, {pipeline_mode = #tpu.pipeline_mode<synchronous>, transform_indices = @transform_2, window_bounds = array<i64: 1, 128>}, {pipeline_mode = #tpu.pipeline_mode<synchronous>, transform_indices = @transform_3, window_bounds = array<i64: 128, 128>}, {pipeline_mode = #tpu.pipeline_mode<synchronous>, transform_indices = @transform_4, window_bounds = array<i64: 1, 128>}, {pipeline_mode = #tpu.pipeline_mode<synchronous>, transform_indices = @transform_5, window_bounds = array<i64: 128, 128>}, {pipeline_mode = #tpu.pipeline_mode<synchronous>, transform_indices = @transform_6, window_bounds = array<i64: 1, 128>}, {pipeline_mode = #tpu.pipeline_mode<synchronous>, transform_indices = @transform_7, window_bounds = array<i64: 128, 128>}, {pipeline_mode = #tpu.pipeline_mode<synchronous>, transform_indices = @transform_8, window_bounds = array<i64: 1, 128>}, {transform_indices = @transform_9, window_bounds = array<i64: 16, 128>}]} {
    %c0 = arith.constant 0 : index
    %c0_0 = arith.constant 0 : index
    %0 = vector.load %arg1[%c0, %c0_0] : memref<16x28xf32, #tpu.memory_space<vmem>>, vector<16x28xf32>
    %1 = arith.truncf %0 : vector<16x28xf32> to vector<16x28xbf16>
    %c0_1 = arith.constant 0 : index
    %c0_2 = arith.constant 0 : index
    %2 = vector.load %arg2[%c0_1, %c0_2] : memref<28x128xbf16, #tpu.memory_space<vmem>>, vector<28x128xbf16>
    %cst = arith.constant dense<0.000000e+00> : vector<16x128xf32>
    %3 = tpu.matmul %1, %2, %cst {dimension_numbers = #tpu.dot_dimension_numbers<[1], [0], [0], [1], [0, 0, 1, 1], [], []>} : vector<16x28xbf16>, vector<28x128xbf16>, vector<16x128xf32> -> vector<16x128xf32>
    %c0_3 = arith.constant 0 : index
    %c0_4 = arith.constant 0 : index
    %4 = vector.load %arg3[%c0_3, %c0_4] : memref<1x128xf32, #tpu.memory_space<vmem>>, vector<1x128xf32>
    %5 = vector.broadcast %4 : vector<1x128xf32> to vector<16x128xf32>
    %6 = arith.addf %3, %5 : vector<16x128xf32>
    %cst_5 = arith.constant 0.000000e+00 : f32
    %7 = vector.broadcast %cst_5 : f32 to vector<16x128xf32>
    %8 = arith.maximumf %6, %7 : vector<16x128xf32>
    %9 = arith.truncf %8 : vector<16x128xf32> to vector<16x128xbf16>
    %c0_6 = arith.constant 0 : index
    %c0_7 = arith.constant 0 : index
    %10 = vector.load %arg4[%c0_6, %c0_7] : memref<128x128xbf16, #tpu.memory_space<vmem>>, vector<128x128xbf16>
    %cst_8 = arith.constant dense<0.000000e+00> : vector<16x128xf32>
    %11 = tpu.matmul %9, %10, %cst_8 {dimension_numbers = #tpu.dot_dimension_numbers<[1], [0], [0], [1], [0, 0, 1, 1], [], []>} : vector<16x128xbf16>, vector<128x128xbf16>, vector<16x128xf32> -> vector<16x128xf32>
    %c0_9 = arith.constant 0 : index
    %c0_10 = arith.constant 0 : index
    %12 = vector.load %arg5[%c0_9, %c0_10] : memref<1x128xf32, #tpu.memory_space<vmem>>, vector<1x128xf32>
    %13 = vector.broadcast %12 : vector<1x128xf32> to vector<16x128xf32>
    %14 = arith.addf %11, %13 : vector<16x128xf32>
    %cst_11 = arith.constant 0.000000e+00 : f32
    %15 = vector.broadcast %cst_11 : f32 to vector<16x128xf32>
    %16 = arith.maximumf %14, %15 : vector<16x128xf32>
    %17 = arith.truncf %16 : vector<16x128xf32> to vector<16x128xbf16>
    %c0_12 = arith.constant 0 : index
    %c0_13 = arith.constant 0 : index
    %18 = vector.load %arg6[%c0_12, %c0_13] : memref<128x128xbf16, #tpu.memory_space<vmem>>, vector<128x128xbf16>
    %cst_14 = arith.constant dense<0.000000e+00> : vector<16x128xf32>
    %19 = tpu.matmul %17, %18, %cst_14 {dimension_numbers = #tpu.dot_dimension_numbers<[1], [0], [0], [1], [0, 0, 1, 1], [], []>} : vector<16x128xbf16>, vector<128x128xbf16>, vector<16x128xf32> -> vector<16x128xf32>
    %c0_15 = arith.constant 0 : index
    %c0_16 = arith.constant 0 : index
    %20 = vector.load %arg7[%c0_15, %c0_16] : memref<1x128xf32, #tpu.memory_space<vmem>>, vector<1x128xf32>
    %21 = vector.broadcast %20 : vector<1x128xf32> to vector<16x128xf32>
    %22 = arith.addf %19, %21 : vector<16x128xf32>
    %cst_17 = arith.constant 0.000000e+00 : f32
    %23 = vector.broadcast %cst_17 : f32 to vector<16x128xf32>
    %24 = arith.maximumf %22, %23 : vector<16x128xf32>
    %25 = arith.truncf %24 : vector<16x128xf32> to vector<16x128xbf16>
    %c0_18 = arith.constant 0 : index
    %c0_19 = arith.constant 0 : index
    %26 = vector.load %arg8[%c0_18, %c0_19] : memref<128x128xbf16, #tpu.memory_space<vmem>>, vector<128x128xbf16>
    %cst_20 = arith.constant dense<0.000000e+00> : vector<16x128xf32>
    %27 = tpu.matmul %25, %26, %cst_20 {dimension_numbers = #tpu.dot_dimension_numbers<[1], [0], [0], [1], [0, 0, 1, 1], [], []>} : vector<16x128xbf16>, vector<128x128xbf16>, vector<16x128xf32> -> vector<16x128xf32>
    %c0_21 = arith.constant 0 : index
    %c0_22 = arith.constant 0 : index
    %28 = vector.load %arg9[%c0_21, %c0_22] : memref<1x128xf32, #tpu.memory_space<vmem>>, vector<1x128xf32>
    %29 = vector.broadcast %28 : vector<1x128xf32> to vector<16x128xf32>
    %30 = arith.addf %27, %29 : vector<16x128xf32>
    %31 = tpu.iota {dimensions = array<i32: 1>} : vector<16x128xi32>
    %c10_i32 = arith.constant 10 : i32
    %32 = vector.broadcast %c10_i32 : i32 to vector<16x128xi32>
    %33 = arith.cmpi slt, %31, %32 : vector<16x128xi32>
    %cst_23 = arith.constant 0xFF800000 : f32
    %34 = vector.broadcast %cst_23 : f32 to vector<16x128xf32>
    %35 = arith.select %33, %30, %34 : vector<16x128xi1>, vector<16x128xf32>
    %cst_24 = arith.constant dense<0xFF800000> : vector<16xf32>
    %36 = vector.multi_reduction <maximumf>, %35, %cst_24 [1] : vector<16x128xf32> to vector<16xf32>
    %37 = vector.shape_cast %36 : vector<16xf32> to vector<16x1xf32>
    %38 = vector.broadcast %37 : vector<16x1xf32> to vector<16x128xf32>
    %39 = arith.subf %35, %38 : vector<16x128xf32>
    %40 = math.exp %39 : vector<16x128xf32>
    %cst_25 = arith.constant dense<0.000000e+00> : vector<16xf32>
    %41 = vector.multi_reduction <add>, %40, %cst_25 [1] : vector<16x128xf32> to vector<16xf32>
    %42 = vector.shape_cast %41 : vector<16xf32> to vector<16x1xf32>
    %43 = tpu.reciprocal %42 {approx = true} : vector<16x1xf32> -> vector<16x1xf32>
    %44 = vector.broadcast %43 : vector<16x1xf32> to vector<16x128xf32>
    %45 = arith.mulf %40, %44 : vector<16x128xf32>
    %46 = arith.truncf %45 : vector<16x128xf32> to vector<16x128xbf16>
    %c0_26 = arith.constant 0 : index
    %c0_27 = arith.constant 0 : index
    %47 = vector.load %arg10[%c0_26, %c0_27] : memref<16x128xbf16, #tpu.memory_space<vmem>>, vector<16x128xbf16>
    tpu.vector_store %arg10[%c0_26, %c0_27], %46 {strides = array<i32>} : memref<16x128xbf16, #tpu.memory_space<vmem>>, vector<16x128xbf16>,
    return
  }
  func.func @transform_0(%arg0: i32) -> (i32, i32) {
    %c0_i32 = arith.constant 0 : i32
    %c0_i32_0 = arith.constant 0 : i32
    return %arg0, %c0_i32 : i32, i32
  }
  func.func @transform_1(%arg0: i32) -> (i32, i32) {
    %c0_i32 = arith.constant 0 : i32
    %c0_i32_0 = arith.constant 0 : i32
    %c0_i32_1 = arith.constant 0 : i32
    return %c0_i32, %c0_i32_0 : i32, i32
  }
  func.func @transform_2(%arg0: i32) -> (i32, i32) {
    %c0_i32 = arith.constant 0 : i32
    %c0_i32_0 = arith.constant 0 : i32
    %c0_i32_1 = arith.constant 0 : i32
    return %c0_i32, %c0_i32_0 : i32, i32
  }
  func.func @transform_3(%arg0: i32) -> (i32, i32) {
    %c0_i32 = arith.constant 0 : i32
    %c0_i32_0 = arith.constant 0 : i32
    %c0_i32_1 = arith.constant 0 : i32
    return %c0_i32, %c0_i32_0 : i32, i32
  }
  func.func @transform_4(%arg0: i32) -> (i32, i32) {
    %c0_i32 = arith.constant 0 : i32
    %c0_i32_0 = arith.constant 0 : i32
    %c0_i32_1 = arith.constant 0 : i32
    return %c0_i32, %c0_i32_0 : i32, i32
  }
  func.func @transform_5(%arg0: i32) -> (i32, i32) {
    %c0_i32 = arith.constant 0 : i32
    %c0_i32_0 = arith.constant 0 : i32
    %c0_i32_1 = arith.constant 0 : i32
    return %c0_i32, %c0_i32_0 : i32, i32
  }
  func.func @transform_6(%arg0: i32) -> (i32, i32) {
    %c0_i32 = arith.constant 0 : i32
    %c0_i32_0 = arith.constant 0 : i32
    %c0_i32_1 = arith.constant 0 : i32
    return %c0_i32, %c0_i32_0 : i32, i32
  }
  func.func @transform_7(%arg0: i32) -> (i32, i32) {
    %c0_i32 = arith.constant 0 : i32
    %c0_i32_0 = arith.constant 0 : i32
    %c0_i32_1 = arith.constant 0 : i32
    return %c0_i32, %c0_i32_0 : i32, i32
  }
  func.func @transform_8(%arg0: i32) -> (i32, i32) {
    %c0_i32 = arith.constant 0 : i32
    %c0_i32_0 = arith.constant 0 : i32
    %c0_i32_1 = arith.constant 0 : i32
    return %c0_i32, %c0_i32_0 : i32, i32
  }
  func.func @transform_9(%arg0: i32) -> (i32, i32) {
    %c0_i32 = arith.constant 0 : i32
    %c0_i32_0 = arith.constant 0 : i32
    return %arg0, %c0_i32 : i32, i32
  }
}

</mosaic_0001>

<llo_original>
// kernel: tpu_custom_call.1
$region0: #{tpu_custom_call.1}
  #allocation0 [shape = 'u32[]', space=smem, size = 0x4, offset = 0x4, fixed_abs, tag = 'smem constant byte address 0x4 - core index']
  #allocation1 [shape = 'u32[72,128]{1,0:T(1,128)}', space=vmem, size = 0x9000, scoped, tag = 'internal scratch']
  %s0 = inlined_call_operand.hbm [shape: f32[16,28], index: 0, kind: input, shape index: {}]
  %s1 = inlined_call_operand.hbm [shape: bf16[28,128], index: 1, kind: input, shape index: {}]
  %s2 = inlined_call_operand.vmem [shape: f32[1,128], index: 2, kind: input, shape index: {}]
  %s3 = inlined_call_operand.hbm [shape: bf16[128,128], index: 3, kind: input, shape index: {}]
  %s4 = inlined_call_operand.vmem [shape: f32[1,128], index: 4, kind: input, shape index: {}]
  %s5 = inlined_call_operand.hbm [shape: bf16[128,128], index: 5, kind: input, shape index: {}]
  %s6 = inlined_call_operand.vmem [shape: f32[1,128], index: 6, kind: input, shape index: {}]
  %s7 = inlined_call_operand.hbm [shape: bf16[128,128], index: 7, kind: input, shape index: {}]
  %s8 = inlined_call_operand.vmem [shape: f32[1,128], index: 8, kind: input, shape index: {}]
  %s9 = inlined_call_operand.hbm [shape: bf16[16,128], index: 9, kind: output, shape index: {}]
  %s10 = sld [smem:[#allocation0]]
  $region66: #{tpu_custom_call.1} parent=0
    _
  %s12 = ssub.s32 1, %s10
  %s13 = scalar_select 0, %s12, %s10
  $region1: #{tpu_custom_call.1} parent=0
    #allocation2 [shape = 'u8[8192]{0}', space=vmem, size = 0x2000, scoped, tag = 'input window, operand 0, single buffered']
    #allocation3 [shape = 's32[1]{0}', space=sflag, size = 0x4, scoped, tag = 'scoped memory for tpu_custom_call.1']
    #allocation4 [shape = 's32[1]{0}', space=sflag, size = 0x4, scoped, tag = 'scoped memory for tpu_custom_call.1']
    #allocation5 [shape = 'u8[8192]{0}', space=vmem, size = 0x2000, scoped, tag = 'input window, operand 1, single buffered']
    #allocation6 [shape = 's32[1]{0}', space=sflag, size = 0x4, scoped, tag = 'scoped memory for tpu_custom_call.1']
    #allocation7 [shape = 'u8[32768]{0}', space=vmem, size = 0x8000, scoped, tag = 'input window, operand 3, single buffered']
    #allocation8 [shape = 'u8[32768]{0}', space=vmem, size = 0x8000, scoped, tag = 'input window, operand 5, single buffered']
    #allocation9 [shape = 's32[1]{0}', space=sflag, size = 0x4, scoped, tag = 'scoped memory for tpu_custom_call.1']
    #allocation10 [shape = 'u8[32768]{0}', space=vmem, size = 0x8000, scoped, tag = 'input window, operand 7, single buffered']
    #allocation11 [shape = 'u8[4096]{0}', space=vmem, size = 0x1000, scoped, tag = 'output window, operand 0, single buffered']
    %14 = vsyncpa [#allocation3], 0
    %15 = vsyncpa [#allocation6], 0
    %16 = vsyncpa [#allocation9], 0
    %17 = vsyncpa [#allocation4], 0
    // Predicated region
    $region2: #{tpu_custom_call.1} parent=1 // pred_check
      _
    $region3: #{tpu_custom_call.1} parent=1 // pred_check_branch
      %19 = sbr.rel (0) target = $region5
    $region4: #{tpu_custom_call.1} parent=1 // pred_region
      %21 = vsyncadd [#allocation3], 0
      %s22 = sshll.u32 %s0, 4
      %s23 = int_to_ptr.hbm [resolvable:$true] %s22
      %s24 = sshll.u32 [#allocation2], 4
      %s25 = int_to_ptr.vmem [resolvable:$true] %s24
      %30 = dma.hbm_to_vmem [thread:$0]  %s23, 256, %s25, [#allocation3], 128, 128, 8
    $region5: #{tpu_custom_call.1} parent=1 // pred_fallthru
      _
    // Predicated region
    $region6: #{tpu_custom_call.1} parent=1 // pred_check
      _
    $region7: #{tpu_custom_call.1} parent=1 // pred_check_branch
      %32 = sbr.rel (0) target = $region9
    $region8: #{tpu_custom_call.1} parent=1 // pred_region
      %34 = vsyncadd [#allocation6], 0
      %s35 = sshll.u32 %s1, 4
      %s36 = int_to_ptr.hbm [resolvable:$true] %s35
      %s37 = sshll.u32 [#allocation5], 4
      %s38 = int_to_ptr.vmem [resolvable:$true] %s37
      %43 = dma.hbm_to_vmem [thread:$0]  %s36, 256, %s38, [#allocation6], 64, 64, 4
    $region9: #{tpu_custom_call.1} parent=1 // pred_fallthru
      _
    // Predicated region
    $region10: #{tpu_custom_call.1} parent=1 // pred_check
      _
    $region11: #{tpu_custom_call.1} parent=1 // pred_check_branch
      %45 = sbr.rel (0) target = $region13
    $region12: #{tpu_custom_call.1} parent=1 // pred_region
      _
    $region13: #{tpu_custom_call.1} parent=1 // pred_fallthru
      _
    // Predicated region
    $region14: #{tpu_custom_call.1} parent=1 // pred_check
      _
    $region15: #{tpu_custom_call.1} parent=1 // pred_check_branch
      %47 = sbr.rel (0) target = $region17
    $region16: #{tpu_custom_call.1} parent=1 // pred_region
      %49 = vsyncadd [#allocation6], 0
      %s50 = sshll.u32 %s3, 4
      %s51 = int_to_ptr.hbm [resolvable:$true] %s50
      %s52 = sshll.u32 [#allocation7], 4
      %s53 = int_to_ptr.vmem [resolvable:$true] %s52
      %58 = dma.hbm_to_vmem [thread:$0]  %s51, 1024, %s53, [#allocation6], 64, 64, 4
    $region17: #{tpu_custom_call.1} parent=1 // pred_fallthru
      _
    // Predicated region
    $region18: #{tpu_custom_call.1} parent=1 // pred_check
      _
    $region19: #{tpu_custom_call.1} parent=1 // pred_check_branch
      %60 = sbr.rel (0) target = $region21
    $region20: #{tpu_custom_call.1} parent=1 // pred_region
      _
    $region21: #{tpu_custom_call.1} parent=1 // pred_fallthru
      _
    // Predicated region
    $region22: #{tpu_custom_call.1} parent=1 // pred_check
      _
    $region23: #{tpu_custom_call.1} parent=1 // pred_check_branch
      %62 = sbr.rel (0) target = $region25
    $region24: #{tpu_custom_call.1} parent=1 // pred_region
      %64 = vsyncadd [#allocation9], 0
      %s65 = sshll.u32 %s5, 4
      %s66 = int_to_ptr.hbm [resolvable:$true] %s65
      %s67 = sshll.u32 [#allocation8], 4
      %s68 = int_to_ptr.vmem [resolvable:$true] %s67
      %73 = dma.hbm_to_vmem [thread:$0]  %s66, 1024, %s68, [#allocation9], 64, 64, 4
    $region25: #{tpu_custom_call.1} parent=1 // pred_fallthru
      _
    // Predicated region
    $region26: #{tpu_custom_call.1} parent=1 // pred_check
      _
    $region27: #{tpu_custom_call.1} parent=1 // pred_check_branch
      %75 = sbr.rel (0) target = $region29
    $region28: #{tpu_custom_call.1} parent=1 // pred_region
      _
    $region29: #{tpu_custom_call.1} parent=1 // pred_fallthru
      _
    // Predicated region
    $region30: #{tpu_custom_call.1} parent=1 // pred_check
      _
    $region31: #{tpu_custom_call.1} parent=1 // pred_check_branch
      %77 = sbr.rel (0) target = $region33
    $region32: #{tpu_custom_call.1} parent=1 // pred_region
      %79 = vsyncadd [#allocation9], 0
      %s80 = sshll.u32 %s7, 4
      %s81 = int_to_ptr.hbm [resolvable:$true] %s80
      %s82 = sshll.u32 [#allocation10], 4
      %s83 = int_to_ptr.vmem [resolvable:$true] %s82
      %88 = dma.hbm_to_vmem [thread:$0]  %s81, 1024, %s83, [#allocation9], 64, 64, 4
    $region33: #{tpu_custom_call.1} parent=1 // pred_fallthru
      _
    // Predicated region
    $region34: #{tpu_custom_call.1} parent=1 // pred_check
      _
    $region35: #{tpu_custom_call.1} parent=1 // pred_check_branch
      %90 = sbr.rel (0) target = $region37
    $region36: #{tpu_custom_call.1} parent=1 // pred_region
      _
    $region37: #{tpu_custom_call.1} parent=1 // pred_fallthru
      _
    // Predicated region
    $region38: #{tpu_custom_call.1} parent=1 // pred_check
      _
    $region39: #{tpu_custom_call.1} parent=1 // pred_check_branch
      %92 = sbr.rel (0) target = $region41
    $region40: #{tpu_custom_call.1} parent=1 // pred_region
      %94 = dma.done [#allocation3], 256
    $region41: #{tpu_custom_call.1} parent=1 // pred_fallthru
      _
    // Predicated region
    $region42: #{tpu_custom_call.1} parent=1 // pred_check
      _
    $region43: #{tpu_custom_call.1} parent=1 // pred_check_branch
      %96 = sbr.rel (0) target = $region45
    $region44: #{tpu_custom_call.1} parent=1 // pred_region
      %98 = dma.done [#allocation6], 256
    $region45: #{tpu_custom_call.1} parent=1 // pred_fallthru
      _
    // Predicated region
    $region46: #{tpu_custom_call.1} parent=1 // pred_check
      _
    $region47: #{tpu_custom_call.1} parent=1 // pred_check_branch
      %100 = sbr.rel (0) target = $region49
    $region48: #{tpu_custom_call.1} parent=1 // pred_region
      %102 = dma.done [#allocation6], 1024
    $region49: #{tpu_custom_call.1} parent=1 // pred_fallthru
      _
    // Predicated region
    $region50: #{tpu_custom_call.1} parent=1 // pred_check
      _
    $region51: #{tpu_custom_call.1} parent=1 // pred_check_branch
      %104 = sbr.rel (0) target = $region53
    $region52: #{tpu_custom_call.1} parent=1 // pred_region
      %106 = dma.done [#allocation9], 1024
    $region53: #{tpu_custom_call.1} parent=1 // pred_fallthru
      _
    // Predicated region
    $region54: #{tpu_custom_call.1} parent=1 // pred_check
      _
    $region55: #{tpu_custom_call.1} parent=1 // pred_check_branch
      %108 = sbr.rel (0) target = $region57
    $region56: #{tpu_custom_call.1} parent=1 // pred_region
      %110 = dma.done [#allocation9], 1024
    $region57: #{tpu_custom_call.1} parent=1 // pred_fallthru
      _
    %v112 = vld [vmem:[#allocation2] sm:$0xff]
    %v113 = vld [vmem:[#allocation2 + $0x8] sm:$0xff]
    %v114 = vpack.c.bf16 %v113, %v112
    %v115 = vld [vmem:[#allocation5] sm:$0xf]
    %v116 = vld [vmem:[#allocation5 + $0x4] sm:$0xf]
    %v117 = vld [vmem:[#allocation5 + $0x8] sm:$0xf]
    %v118 = vld [vmem:[#allocation5 + $0xc] sm:$0x3]
    %v119 = vld [vmem:[%s2] sm:$0x1]
    %v121 = vperm.slane %v119, 0
    %v127 = vunpack.c.l.b16 %v115
    %v128 = vunpack.c.l.b16 %v116
    %v129 = vunpack.c.l.b16 %v117
    %v130 = vunpack.c.l.b16 %v118
    %v131 = vpack.c.b16 %v128, %v127
    %v132 = vpack.c.b16 %v130, %v129
    %vm134 = vcmask 228352
    %v136 = vsel %vm134, %v114, 0
    %vm138 = vcmask 1045504
    %v140 = vsel %vm138, %v132, 0
    %142 = vmatpush.bf16.msra.mxu0 0
    %143 = vmatpush.bf16.msra.mxu0 0
    %144 = vmatpush.bf16.msra.mxu0 0
    %145 = vmatpush.bf16.msra.mxu0 0
    %146 = vmatpush.bf16.msra.mxu0 0
    %147 = vmatpush.bf16.msra.mxu0 0
    %148 = vmatpush.bf16.msra.mxu0 %v140
    %149 = vmatpush.bf16.msra.mxu0 %v131
    %150 = vmatmul.bf16.gmra.mxu0 %v136
    %v151 = vpop.f32.mrf.mxu0
    %v152 = vadd.f32 %v121, %v151
    %v153 = vpop.f32.mrf.mxu0
    %v154 = vadd.f32 %v121, %v153
    %155 = vdwg.mxu0
    %v156 = vmax.f32 %v152, 0.0
    %v157 = vmax.f32 %v154, 0.0
    %v158 = vpack.c.bf16 %v157, %v156
    %v159 = vld [vmem:[#allocation7] sm:$0xf]
    %v160 = vld [vmem:[#allocation7 + $0x4] sm:$0xf]
    %v161 = vld [vmem:[#allocation7 + $0x8] sm:$0xf]
    %v162 = vld [vmem:[#allocation7 + $0xc] sm:$0xf]
    %v163 = vld [vmem:[#allocation7 + $0x10] sm:$0xf]
    %v164 = vld [vmem:[#allocation7 + $0x14] sm:$0xf]
    %v165 = vld [vmem:[#allocation7 + $0x18] sm:$0xf]
    %v166 = vld [vmem:[#allocation7 + $0x1c] sm:$0xf]
    %v167 = vld [vmem:[#allocation7 + $0x20] sm:$0xf]
    %v168 = vld [vmem:[#allocation7 + $0x24] sm:$0xf]
    %v169 = vld [vmem:[#allocation7 + $0x28] sm:$0xf]
    %v170 = vld [vmem:[#allocation7 + $0x2c] sm:$0xf]
    %v171 = vld [vmem:[#allocation7 + $0x30] sm:$0xf]
    %v172 = vld [vmem:[#allocation7 + $0x34] sm:$0xf]
    %v173 = vld [vmem:[#allocation7 + $0x38] sm:$0xf]
    %v174 = vld [vmem:[#allocation7 + $0x3c] sm:$0xf]
    %v175 = vld [vmem:[%s4] sm:$0x1]
    %v177 = vperm.slane %v175, 0
    %v195 = vunpack.c.l.b16 %v159
    %v196 = vunpack.c.l.b16 %v160
    %v197 = vunpack.c.l.b16 %v161
    %v198 = vunpack.c.l.b16 %v162
    %v199 = vunpack.c.l.b16 %v163
    %v200 = vunpack.c.l.b16 %v164
    %v201 = vunpack.c.l.b16 %v165
    %v202 = vunpack.c.l.b16 %v166
    %v203 = vunpack.c.l.b16 %v167
    %v204 = vunpack.c.l.b16 %v168
    %v205 = vunpack.c.l.b16 %v169
    %v206 = vunpack.c.l.b16 %v170
    %v207 = vunpack.c.l.b16 %v171
    %v208 = vunpack.c.l.b16 %v172
    %v209 = vunpack.c.l.b16 %v173
    %v210 = vunpack.c.l.b16 %v174
    %v211 = vpack.c.b16 %v196, %v195
    %v212 = vpack.c.b16 %v198, %v197
    %v213 = vpack.c.b16 %v200, %v199
    %v214 = vpack.c.b16 %v202, %v201
    %v215 = vpack.c.b16 %v204, %v203
    %v216 = vpack.c.b16 %v206, %v205
    %v217 = vpack.c.b16 %v208, %v207
    %v218 = vpack.c.b16 %v210, %v209
    %227 = vmatpush.bf16.msra.mxu0 %v218
    %228 = vmatpush.bf16.msra.mxu0 %v217
    %229 = vmatpush.bf16.msra.mxu0 %v216
    %230 = vmatpush.bf16.msra.mxu0 %v215
    %231 = vmatpush.bf16.msra.mxu0 %v214
    %232 = vmatpush.bf16.msra.mxu0 %v213
    %233 = vmatpush.bf16.msra.mxu0 %v212
    %234 = vmatpush.bf16.msra.mxu0 %v211
    %235 = vmatmul.bf16.gmra.mxu0 %v158
    %v236 = vpop.f32.mrf.mxu0
    %v237 = vadd.f32 %v177, %v236
    %v238 = vpop.f32.mrf.mxu0
    %v239 = vadd.f32 %v177, %v238
    %240 = vdwg.mxu0
    %v241 = vmax.f32 %v237, 0.0
    %v242 = vmax.f32 %v239, 0.0
    %v243 = vpack.c.bf16 %v242, %v241
    %v244 = vld [vmem:[#allocation8] sm:$0xf]
    %v245 = vld [vmem:[#allocation8 + $0x4] sm:$0xf]
    %v246 = vld [vmem:[#allocation8 + $0x8] sm:$0xf]
    %v247 = vld [vmem:[#allocation8 + $0xc] sm:$0xf]
    %v248 = vld [vmem:[#allocation8 + $0x10] sm:$0xf]
    %v249 = vld [vmem:[#allocation8 + $0x14] sm:$0xf]
    %v250 = vld [vmem:[#allocation8 + $0x18] sm:$0xf]
    %v251 = vld [vmem:[#allocation8 + $0x1c] sm:$0xf]
    %v252 = vld [vmem:[#allocation8 + $0x20] sm:$0xf]
    %v253 = vld [vmem:[#allocation8 + $0x24] sm:$0xf]
    %v254 = vld [vmem:[#allocation8 + $0x28] sm:$0xf]
    %v255 = vld [vmem:[#allocation8 + $0x2c] sm:$0xf]
    %v256 = vld [vmem:[#allocation8 + $0x30] sm:$0xf]
    %v257 = vld [vmem:[#allocation8 + $0x34] sm:$0xf]
    %v258 = vld [vmem:[#allocation8 + $0x38] sm:$0xf]
    %v259 = vld [vmem:[#allocation8 + $0x3c] sm:$0xf]
    %v260 = vld [vmem:[%s6] sm:$0x1]
    %v262 = vperm.slane %v260, 0
    %v280 = vunpack.c.l.b16 %v244
    %v281 = vunpack.c.l.b16 %v245
    %v282 = vunpack.c.l.b16 %v246
    %v283 = vunpack.c.l.b16 %v247
    %v284 = vunpack.c.l.b16 %v248
    %v285 = vunpack.c.l.b16 %v249
    %v286 = vunpack.c.l.b16 %v250
    %v287 = vunpack.c.l.b16 %v251
    %v288 = vunpack.c.l.b16 %v252
    %v289 = vunpack.c.l.b16 %v253
    %v290 = vunpack.c.l.b16 %v254
    %v291 = vunpack.c.l.b16 %v255
    %v292 = vunpack.c.l.b16 %v256
    %v293 = vunpack.c.l.b16 %v257
    %v294 = vunpack.c.l.b16 %v258
    %v295 = vunpack.c.l.b16 %v259
    %v296 = vpack.c.b16 %v281, %v280
    %v297 = vpack.c.b16 %v283, %v282
    %v298 = vpack.c.b16 %v285, %v284
    %v299 = vpack.c.b16 %v287, %v286
    %v300 = vpack.c.b16 %v289, %v288
    %v301 = vpack.c.b16 %v291, %v290
    %v302 = vpack.c.b16 %v293, %v292
    %v303 = vpack.c.b16 %v295, %v294
    %312 = vmatpush.bf16.msra.mxu0 %v303
    %313 = vmatpush.bf16.msra.mxu0 %v302
    %314 = vmatpush.bf16.msra.mxu0 %v301
    %315 = vmatpush.bf16.msra.mxu0 %v300
    %316 = vmatpush.bf16.msra.mxu0 %v299
    %317 = vmatpush.bf16.msra.mxu0 %v298
    %318 = vmatpush.bf16.msra.mxu0 %v297
    %319 = vmatpush.bf16.msra.mxu0 %v296
    %320 = vmatmul.bf16.gmra.mxu0 %v243
    %v321 = vpop.f32.mrf.mxu0
    %v322 = vadd.f32 %v262, %v321
    %v323 = vpop.f32.mrf.mxu0
    %v324 = vadd.f32 %v262, %v323
    %325 = vdwg.mxu0
    %v326 = vmax.f32 %v322, 0.0
    %v327 = vmax.f32 %v324, 0.0
    %v328 = vpack.c.bf16 %v327, %v326
    %v329 = vld [vmem:[#allocation10] sm:$0xf]
    %v330 = vld [vmem:[#allocation10 + $0x4] sm:$0xf]
    %v331 = vld [vmem:[#allocation10 + $0x8] sm:$0xf]
    %v332 = vld [vmem:[#allocation10 + $0xc] sm:$0xf]
    %v333 = vld [vmem:[#allocation10 + $0x10] sm:$0xf]
    %v334 = vld [vmem:[#allocation10 + $0x14] sm:$0xf]
    %v335 = vld [vmem:[#allocation10 + $0x18] sm:$0xf]
    %v336 = vld [vmem:[#allocation10 + $0x1c] sm:$0xf]
    %v337 = vld [vmem:[#allocation10 + $0x20] sm:$0xf]
    %v338 = vld [vmem:[#allocation10 + $0x24] sm:$0xf]
    %v339 = vld [vmem:[#allocation10 + $0x28] sm:$0xf]
    %v340 = vld [vmem:[#allocation10 + $0x2c] sm:$0xf]
    %v341 = vld [vmem:[#allocation10 + $0x30] sm:$0xf]
    %v342 = vld [vmem:[#allocation10 + $0x34] sm:$0xf]
    %v343 = vld [vmem:[#allocation10 + $0x38] sm:$0xf]
    %v344 = vld [vmem:[#allocation10 + $0x3c] sm:$0xf]
    %v345 = vld [vmem:[%s8] sm:$0x1]
    %v347 = vperm.slane %v345, 0
    %v365 = vunpack.c.l.b16 %v329
    %v366 = vunpack.c.l.b16 %v330
    %v367 = vunpack.c.l.b16 %v331
    %v368 = vunpack.c.l.b16 %v332
    %v369 = vunpack.c.l.b16 %v333
    %v370 = vunpack.c.l.b16 %v334
    %v371 = vunpack.c.l.b16 %v335
    %v372 = vunpack.c.l.b16 %v336
    %v373 = vunpack.c.l.b16 %v337
    %v374 = vunpack.c.l.b16 %v338
    %v375 = vunpack.c.l.b16 %v339
    %v376 = vunpack.c.l.b16 %v340
    %v377 = vunpack.c.l.b16 %v341
    %v378 = vunpack.c.l.b16 %v342
    %v379 = vunpack.c.l.b16 %v343
    %v380 = vunpack.c.l.b16 %v344
    %v381 = vpack.c.b16 %v366, %v365
    %v382 = vpack.c.b16 %v368, %v367
    %v383 = vpack.c.b16 %v370, %v369
    %v384 = vpack.c.b16 %v372, %v371
    %v385 = vpack.c.b16 %v374, %v373
    %v386 = vpack.c.b16 %v376, %v375
    %v387 = vpack.c.b16 %v378, %v377
    %v388 = vpack.c.b16 %v380, %v379
    %397 = vmatpush.bf16.msra.mxu0 %v388
    %398 = vmatpush.bf16.msra.mxu0 %v387
    %399 = vmatpush.bf16.msra.mxu0 %v386
    %400 = vmatpush.bf16.msra.mxu0 %v385
    %401 = vmatpush.bf16.msra.mxu0 %v384
    %402 = vmatpush.bf16.msra.mxu0 %v383
    %403 = vmatpush.bf16.msra.mxu0 %v382
    %404 = vmatpush.bf16.msra.mxu0 %v381
    %405 = vmatmul.bf16.gmra.mxu0 %v328
    %v406 = vpop.f32.mrf.mxu0
    %v407 = vadd.f32 %v347, %v406
    %v408 = vpop.f32.mrf.mxu0
    %v409 = vadd.f32 %v347, %v408
    %410 = vdwg.mxu0
    %v411 = vlaneseq
    %v412 = vand.u32 %v411, 127
    %vm413 = vcmp.lt.s32.totalorder %v412, 10
    %v414 = vsel %vm413, %v407, -inf
    %v415 = vsel %vm413, %v409, -inf
    %416 = vmax.xlane.f32.xlu0 %v414
    %v417 = vpop.xlane.xlu0 %416
    %418 = vmax.xlane.f32.xlu0 %v415
    %v419 = vpop.xlane.xlu0 %418
    %v420 = vsub.f32 %v414, %v417
    %v421 = vsub.f32 %v415, %v419
    %v422 = vmul.f32 %v420, 1.442695
    %v423 = vpow.pop %v422
    %v424 = vmul.f32 %v421, 1.442695
    %v425 = vpow.pop %v424
    %426 = vadd.xlane.f32.xlu0 %v423
    %v427 = vpop.xlane.xlu0 %426
    %428 = vadd.xlane.f32.xlu0 %v425
    %v429 = vpop.xlane.xlu0 %428
    %v430 = vrcp.pop %v427
    %v431 = vrcp.pop %v429
    %v432 = vmul.f32 %v423, %v430
    %v433 = vmul.f32 %v425, %v431
    %v434 = vpack.c.bf16 %v432, %v432
    %v435 = vpack.c.bf16 %v433, %v433
    %436 = vst [vmem:[#allocation11] sm:$0xf] %v434
    %437 = vst [vmem:[#allocation11 + $0x4] sm:$0xf] %v435
    // Predicated region
    $region58: #{tpu_custom_call.1} parent=1 // pred_check
      _
    $region59: #{tpu_custom_call.1} parent=1 // pred_check_branch
      %439 = sbr.rel (0) target = $region61
    $region60: #{tpu_custom_call.1} parent=1 // pred_region
      %441 = vsyncadd [#allocation4], 0
      %s442 = sshll.u32 [#allocation11], 4
      %s443 = int_to_ptr.vmem [resolvable:$true] %s442
      %s444 = sshll.u32 %s9, 4
      %s445 = int_to_ptr.hbm [resolvable:$true] %s444
      %450 = dma.vmem_to_hbm [thread:$0]  %s443, 128, %s445, [#allocation4], 64, 64, 4
    $region61: #{tpu_custom_call.1} parent=1 // pred_fallthru
      _
    // Predicated region
    $region62: #{tpu_custom_call.1} parent=1 // pred_check
      _
    $region63: #{tpu_custom_call.1} parent=1 // pred_check_branch
      %452 = sbr.rel (0) target = $region65
    $region64: #{tpu_custom_call.1} parent=1 // pred_region
      %454 = dma.done [#allocation4], 128
    $region65: #{tpu_custom_call.1} parent=1 // pred_fallthru
      _
    %455 = vsyncpa [#allocation3], 1
    %456 = vsyncpa [#allocation6], 1
    %457 = vsyncpa [#allocation9], 1
    %458 = vsyncpa [#allocation4], 1

</llo_original>
